<compile_context>
chip_gen: v7x
topology: tpu7x:2x2x1
jax: 0.10.0
libtpu: 0.0.40
codegen_flags: <defaults>
</compile_context>

<pallas_src>
import jax
import jax.numpy as jnp
from jax import lax
from jax.experimental import pallas as pl
from jax.experimental.pallas import tpu as pltpu

EPS = 1e-5
LANE = 128
MAX_BAND = 2048          # max output rows (Ho*Wo) per grid step

_CompilerParams = getattr(pltpu, "CompilerParams", None)
if _CompilerParams is None:  # compat with older jax releases
    _CompilerParams = getattr(pltpu, "TPUCompilerParams")

_VMEM_LIMIT = None


def _round_up(v, m):
    return ((v + m - 1) // m) * m


def _vmem_limit_bytes():
    """Generation-aware scoped-VMEM cap: 3/4 of physical VMEM (v5e/v6e ~96MiB, v7x ~48MiB)."""
    global _VMEM_LIMIT
    if _VMEM_LIMIT is None:
        limit = 64 * 1024 * 1024
        try:
            if hasattr(pltpu, "get_tpu_info"):
                cap = getattr(pltpu.get_tpu_info(), "vmem_capacity_bytes", None)
                if cap:
                    limit = int(cap) * 3 // 4
        except Exception:
            pass
        _VMEM_LIMIT = limit
    return _VMEM_LIMIT


def _compiler_params(dim_semantics):
    return _CompilerParams(dimension_semantics=dim_semantics,
                           vmem_limit_bytes=_vmem_limit_bytes())


def _pick_band(howo):
    """Row-band size for the (batch, band) grid; whole image if it is already small."""
    if howo <= MAX_BAND:
        return howo
    for d in (2048, 1024, 512, 256, 128):
        if howo % d == 0:
            return d
    return howo


# ----------------------------- Pallas kernels ------------------------------ #

def _stats8(acc):
    """Per-channel (sum, sum_sq) packed into a single unmasked 8-sublane tile."""
    s1 = jnp.sum(acc, axis=0, keepdims=True)
    s2 = jnp.sum(acc * acc, axis=0, keepdims=True)
    rows = lax.broadcasted_iota(jnp.int32, (8, acc.shape[1]), 0)
    return jnp.where(rows == 0, s1, jnp.where(rows == 1, s2, 0.0))


def _packed_conv_kernel(x_ref, w_ref, raw_ref, st_ref):
    """Packed-K conv: one bf16 MXU matmul (f32 accum) per (batch, row-band) tile + stats."""
    acc = jnp.dot(x_ref[0], w_ref[...], preferred_element_type=jnp.float32)
    raw_ref[0] = acc.astype(raw_ref.dtype)
    st_ref[0, 0] = _stats8(acc)


def _make_tap_conv_kernel(taps, Ho, Wo):
    """Fallback per-tap conv (large channel counts): KH*KW lane-dense matmuls, accumulated."""
    HoWo = Ho * Wo

    def kernel(x_ref, w_ref, raw_ref, st_ref):
        acc = None
        for t, (p, dh, dw) in enumerate(taps):
            win = x_ref[0, p, dh:dh + Ho, dw:dw + Wo, :]
            win = win.reshape(HoWo, win.shape[-1])
            part = jnp.dot(win, w_ref[t], preferred_element_type=jnp.float32)
            acc = part if acc is None else acc + part
        raw_ref[0] = acc.astype(raw_ref.dtype)
        st_ref[0] = _stats8(acc)

    return kernel


def _tail_identity_kernel(raw2_ref, xr_ref, sc2_ref, sh2_ref, o_ref):
    """BN2 + identity residual add + final ReLU."""
    left = raw2_ref[...].astype(jnp.float32) * sc2_ref[...] + sh2_ref[...]
    o_ref[...] = jnp.maximum(left + xr_ref[...].astype(jnp.float32), 0.0)


def _tail_downsample_kernel(raw2_ref, rawr_ref, sc2_ref, sh2_ref, scr_ref, shr_ref, o_ref):
    """BN2 + (1x1 conv + BN) residual add + final ReLU."""
    left = raw2_ref[...].astype(jnp.float32) * sc2_ref[...] + sh2_ref[...]
    right = rawr_ref[...].astype(jnp.float32) * scr_ref[...] + shr_ref[...]
    o_ref[...] = jnp.maximum(left + right, 0.0)


# --------------------------- pallas_call wrappers --------------------------- #

def _packed_conv_call(col, wmat):
    N, HoWo, Kp = col.shape
    _, Cout_p = wmat.shape
    band = _pick_band(HoWo)
    nbands = HoWo // band
    return pl.pallas_call(
        _packed_conv_kernel,
        out_shape=(jax.ShapeDtypeStruct((N, HoWo, Cout_p), jnp.bfloat16),
                   jax.ShapeDtypeStruct((N, nbands, 8, Cout_p), jnp.float32)),
        grid_spec=pltpu.PrefetchScalarGridSpec(
            num_scalar_prefetch=0,
            grid=(N, nbands),
            in_specs=[
                pl.BlockSpec((1, band, Kp), lambda n, b: (n, b, 0)),
                # Constant index_map -> resident weights (tiny here).
                # TODO(synk): pl.Buffered(1) or manual-DMA scratch for 512-channel layers.
                pl.BlockSpec((Kp, Cout_p), lambda n, b: (0, 0)),
            ],
            out_specs=[
                pl.BlockSpec((1, band, Cout_p), lambda n, b: (n, b, 0)),
                pl.BlockSpec((1, 1, 8, Cout_p), lambda n, b: (n, b, 0, 0)),
            ],
        ),
        compiler_params=_compiler_params(("parallel", "parallel")),
    )(col, wmat)


def _tap_conv_call(xph, w_taps, taps, Ho, Wo):
    N, n_ph, Hph, Wph, Cin_p = xph.shape
    n_taps, _, Cout_p = w_taps.shape
    HoWo = Ho * Wo
    kernel = _make_tap_conv_kernel(taps, Ho, Wo)
    return pl.pallas_call(
        kernel,
        out_shape=(jax.ShapeDtypeStruct((N, HoWo, Cout_p), jnp.bfloat16),
                   jax.ShapeDtypeStruct((N, 8, Cout_p), jnp.float32)),
        grid_spec=pltpu.PrefetchScalarGridSpec(
            num_scalar_prefetch=0,
            grid=(N,),
            in_specs=[
                pl.BlockSpec((1, n_ph, Hph, Wph, Cin_p), lambda n: (n, 0, 0, 0, 0)),
                pl.BlockSpec((n_taps, Cin_p, Cout_p), lambda n: (0, 0, 0)),
            ],
            out_specs=[
                pl.BlockSpec((1, HoWo, Cout_p), lambda n: (n, 0, 0)),
                pl.BlockSpec((1, 8, Cout_p), lambda n: (n, 0, 0)),
            ],
        ),
        compiler_params=_compiler_params(("parallel",)),
    )(xph, w_taps)


def _tail_call(kernel, bigs, smalls):
    """Fused epilogue over (N, Ho*Wo, Cp): grid = (batch, row-band)."""
    N, HoWo, Cp = bigs[0].shape
    band = _pick_band(HoWo)
    nbands = HoWo // band
    big_spec = pl.BlockSpec((1, band, Cp), lambda n, b: (n, b, 0))
    small_spec = pl.BlockSpec((1, 1, Cp), lambda n, b: (0, 0, 0))
    return pl.pallas_call(
        kernel,
        out_shape=jax.ShapeDtypeStruct((N, HoWo, Cp), jnp.float32),
        grid_spec=pltpu.PrefetchScalarGridSpec(
            num_scalar_prefetch=0,
            grid=(N, nbands),
            in_specs=[big_spec] * len(bigs) + [small_spec] * len(smalls),
            out_specs=pl.BlockSpec((1, band, Cp), lambda n, b: (n, b, 0)),
        ),
        compiler_params=_compiler_params(("parallel", "parallel")),
    )(*bigs, *smalls)


# ------------------------------- glue (JAX) -------------------------------- #

def _im2col_packed(x_nhwc, ksize, stride, padding, Ho, Wo, Kp):
    """All-taps-packed im2col (XLA glue): (N, Ho*Wo, KH*KW*Cin) lane-padded to Kp, bf16."""
    N, H, W, C = x_nhwc.shape
    xpad = jnp.pad(x_nhwc, ((0, 0), (padding, padding), (padding, padding), (0, 0)))
    cols = []
    for kh in range(ksize):
        for kw in range(ksize):
            cols.append(xpad[:, kh:kh + stride * (Ho - 1) + 1:stride,
                             kw:kw + stride * (Wo - 1) + 1:stride, :])
    col = jnp.concatenate(cols, axis=-1).reshape(N, Ho * Wo, ksize * ksize * C)
    col = jnp.pad(col, ((0, 0), (0, 0), (0, Kp - ksize * ksize * C)))
    return col.astype(jnp.bfloat16)


def _packed_weight(w, Kp, Cout_p):
    """OIHW -> ((kh,kw,cin), Cout) packed contraction matrix, padded + bf16."""
    Cout, Cin, KH, KW = w.shape
    wmat = jnp.transpose(w.astype(jnp.float32), (2, 3, 1, 0)).reshape(KH * KW * Cin, Cout)
    wmat = jnp.pad(wmat, ((0, Kp - KH * KW * Cin), (0, Cout_p - Cout)))
    return wmat.astype(jnp.bfloat16)


def _conv_prep(x_nhwc, ksize, stride, padding, Ho, Wo):
    """Pad + phase-decompose so every conv tap is a unit-stride static window (fallback path)."""
    N, H, W, C = x_nhwc.shape
    max_d = (ksize - 1) // stride
    Hph, Wph = Ho + max_d, Wo + max_d
    TH = max(H + 2 * padding, stride * Hph)
    TW = max(W + 2 * padding, stride * Wph)
    xpad = jnp.pad(x_nhwc, ((0, 0),
                            (padding, TH - H - padding),
                            (padding, TW - W - padding),
                            (0, 0)))
    phase_of, phases, taps = {}, [], []
    for kh in range(ksize):
        for kw in range(ksize):
            key = (kh % stride, kw % stride)
            if key not in phase_of:
                a, b = key
                phase_of[key] = len(phases)
                phases.append(xpad[:, a::stride, b::stride, :][:, :Hph, :Wph, :])
            taps.append((phase_of[key], kh // stride, kw // stride))
    xph = jnp.stack(phases, axis=1)
    return xph, taps


def _weights_to_taps(w, Cin_p, Cout_p):
    """(Cout, Cin, kh, kw) OIHW -> (kh*kw, Cin_p, Cout_p) row-major taps, lane-padded, bf16."""
    Cout, Cin, KH, KW = w.shape
    mats = []
    for kh in range(KH):
        for kw in range(KW):
            m = jnp.transpose(w[:, :, kh, kw].astype(jnp.float32), (1, 0))
            mats.append(jnp.pad(m, ((0, Cin_p - Cin), (0, Cout_p - Cout))))
    return jnp.stack(mats, axis=0).astype(jnp.bfloat16)


def _conv2d_stats(x_nhwc, w, stride, padding, Ho, Wo, force_per_tap=False):
    """Conv (no bias) + per-channel (sum, sum_sq) of the conv output.

    Returns raw (N, Ho*Wo, Cout_p) bf16 and reduced stats (8, Cout_p) f32
    (row 0 = sum, row 1 = sum of squares)."""
    Cout, Cin, KH, KW = w.shape
    Cout_p = _round_up(Cout, LANE)
    if (not force_per_tap) and KH * KW * Cin <= LANE:
        Kp = _round_up(KH * KW * Cin, LANE)
        col = _im2col_packed(x_nhwc, KH, stride, padding, Ho, Wo, Kp)
        wmat = _packed_weight(w, Kp, Cout_p)
        raw, st = _packed_conv_call(col, wmat)
        st = st.reshape(-1, 8, Cout_p).sum(axis=0)
    else:
        Cin_p = _round_up(Cin, LANE)
        x_p = jnp.pad(x_nhwc, ((0, 0), (0, 0), (0, 0), (0, Cin_p - Cin))).astype(jnp.bfloat16)
        xph, taps = _conv_prep(x_p, KH, stride, padding, Ho, Wo)
        w_taps = _weights_to_taps(w, Cin_p, Cout_p)
        raw, st = _tap_conv_call(xph, w_taps, taps, Ho, Wo)
        st = st.sum(axis=0)
    return raw, st


def _bn_scale_shift(st, m_total, gamma, beta, Cout_p):
    """Fold the reference BN ((x-mean)/(sqrt(var)+eps); gamma*..+beta) into scale/shift."""
    mean = st[0] / m_total
    # NOTE: E[x^2] - E[x]^2 in f32; fine at these scales, use a two-pass reduction for
    # very large / deep activations where |mean| >> std.
    var = jnp.maximum(st[1] / m_total - mean * mean, 0.0)   # unbiased=False
    C = gamma.shape[0]
    gp = jnp.zeros((Cout_p,), jnp.float32).at[:C].set(gamma.astype(jnp.float32))
    bp = jnp.zeros((Cout_p,), jnp.float32).at[:C].set(beta.astype(jnp.float32))
    scale = gp / (jnp.sqrt(var) + EPS)                      # eps OUTSIDE sqrt, as in reference
    shift = bp - scale * mean
    return scale.reshape(1, 1, Cout_p), shift.reshape(1, 1, Cout_p)


def residual_block_forward(x_nchw, params, first_stride, *, force_per_tap=False):
    N, Cin, H, W = x_nchw.shape
    Cout = params["w1"].shape[0]
    s = first_stride
    Ho = (H + 2 - 3) // s + 1
    Wo = (W + 2 - 3) // s + 1
    Cout_p = _round_up(Cout, LANE)
    m_total = float(N * Ho * Wo)

    x = jnp.transpose(x_nchw, (0, 2, 3, 1)).astype(jnp.float32)      # NHWC, real channels

    # ---- left branch, conv1 (3x3, stride=s, pad=1): conv + stats (Pallas) ----
    raw1, st1 = _conv2d_stats(x, params["w1"], s, 1, Ho, Wo, force_per_tap)
    sc1, sh1 = _bn_scale_shift(st1, m_total, params["bn1_w"], params["bn1_b"], Cout_p)
    # BN1 + ReLU fused into the XLA glue that builds conv2's operand (no y1 round trip).
    y1 = jnp.maximum(raw1.astype(jnp.float32) * sc1 + sh1, 0.0)
    y1_img = y1.reshape(N, Ho, Wo, Cout_p)[..., :Cout]

    # ---- left branch, conv2 (3x3, stride=1, pad=1): conv + stats (Pallas) ----
    raw2, st2 = _conv2d_stats(y1_img, params["w2"], 1, 1, Ho, Wo, force_per_tap)
    sc2, sh2 = _bn_scale_shift(st2, m_total, params["bn2_w"], params["bn2_b"], Cout_p)

    # ---- right branch + add + final ReLU (fused Pallas epilogue) ----
    if s == 1 and Cin == Cout:
        xr = jnp.pad(x, ((0, 0), (0, 0), (0, 0), (0, Cout_p - Cin)))
        xr = xr.reshape(N, H * W, Cout_p).astype(jnp.bfloat16)
        out = _tail_call(_tail_identity_kernel, [raw2, xr], [sc2, sh2])
    else:
        rawr, str_ = _conv2d_stats(x, params["wr"], s, 0, Ho, Wo, force_per_tap)
        scr, shr = _bn_scale_shift(str_, m_total, params["bnr_w"], params["bnr_b"], Cout_p)
        out = _tail_call(_tail_downsample_kernel, [raw2, rawr], [sc2, sh2, scr, shr])

    out = out.reshape(N, Ho, Wo, Cout_p)[:, :, :, :Cout]
    return jnp.transpose(out, (0, 3, 1, 2))                          # back to NCHW


# ------------------------- pure-JAX reference check ------------------------ #

def _ref_conv(x, w, stride, padding):
    return lax.conv_general_dilated(
        x, w, (stride, stride), [(padding, padding)] * 2,
        dimension_numbers=("NCHW", "OIHW", "NCHW"))


def _ref_bn(x, gamma, beta):
    mean = x.mean(axis=(0, 2, 3), keepdims=True)
    var = ((x - mean) ** 2).mean(axis=(0, 2, 3), keepdims=True)
    y = (x - mean) / (jnp.sqrt(var) + EPS)
    return gamma.reshape(1, -1, 1, 1) * y + beta.reshape(1, -1, 1, 1)


def residual_block_reference(x, params, first_stride):
    Cin, Cout = x.shape[1], params["w1"].shape[0]
    left = _ref_conv(x, params["w1"], first_stride, 1)
    left = _ref_bn(left, params["bn1_w"], params["bn1_b"])
    left = jnp.maximum(left, 0.0)
    left = _ref_conv(left, params["w2"], 1, 1)
    left = _ref_bn(left, params["bn2_w"], params["bn2_b"])
    if first_stride == 1 and Cin == Cout:
        right = x
    else:
        right = _ref_conv(x, params["wr"], first_stride, 0)
        right = _ref_bn(right, params["bnr_w"], params["bnr_b"])
    return jnp.maximum(left + right, 0.0)


# --------------------------------- params ---------------------------------- #

def init_params(key, in_feats, out_feats, first_stride):
    ks = jax.random.split(key, 3)

    def conv_w(k, cout, cin, ksize):
        fan = cin * ksize * ksize
        # torch: (rand()-0.5)/0.5 * 1/sqrt(fan)  ==  U[-1, 1) / sqrt(fan)
        return jax.random.uniform(k, (cout, cin, ksize, ksize),
                                  minval=-1.0, maxval=1.0,
                                  dtype=jnp.float32) / jnp.sqrt(float(fan))

    p = {
        "w1": conv_w(ks[0], out_feats, in_feats, 3),
        "bn1_w": jnp.ones((out_feats,), jnp.float32),
        "bn1_b": jnp.zeros((out_feats,), jnp.float32),
        "w2": conv_w(ks[1], out_feats, out_feats, 3),
        "bn2_w": jnp.ones((out_feats,), jnp.float32),
        "bn2_b": jnp.zeros((out_feats,), jnp.float32),
    }
    if not (first_stride == 1 and in_feats == out_feats):
        p["wr"] = conv_w(ks[2], out_feats, in_feats, 1)
        p["bnr_w"] = jnp.ones((out_feats,), jnp.float32)
        p["bnr_b"] = jnp.zeros((out_feats,), jnp.float32)
    return p


# ---------------------------------- main ------------------------------------ #

if __name__ == "__main__":
    ATOL = RTOL = 5e-2   # bf16 MXU operands / streamed intermediates (f32 accumulation)
    key = jax.random.PRNGKey(0)
    kx, kp1, kp2 = jax.random.split(key, 3)

    x = jax.random.normal(kx, (2, 4, 16, 16), dtype=jnp.float32)

    # Case 1: downsampling residual block (in=4 -> out=8, stride 2), packed-K conv path.
    params_ds = init_params(kp1, in_feats=4, out_feats=8, first_stride=2)
    out_ds = jax.block_until_ready(residual_block_forward(x, params_ds, first_stride=2))
    ref_ds = residual_block_reference(x, params_ds, first_stride=2)
    assert out_ds.shape == (2, 8, 8, 8)
    assert jnp.allclose(out_ds, ref_ds, atol=ATOL, rtol=RTOL), \
        f"max abs diff {float(jnp.max(jnp.abs(out_ds - ref_ds)))}"

    # Case 2: shape-preserving residual block (identity right branch), packed-K path.
    params_id = init_params(kp2, in_feats=4, out_feats=4, first_stride=1)
    out_id = jax.block_until_ready(residual_block_forward(x, params_id, first_stride=1))
    ref_id = residual_block_reference(x, params_id, first_stride=1)
    assert out_id.shape == (2, 4, 16, 16)
    assert jnp.allclose(out_id, ref_id, atol=ATOL, rtol=RTOL), \
        f"max abs diff {float(jnp.max(jnp.abs(out_id - ref_id)))}"

    # Case 3: same as case 1 but forcing the per-tap fallback kernel (large-channel path).
    out_tap = jax.block_until_ready(
        residual_block_forward(x, params_ds, first_stride=2, force_per_tap=True))
    assert jnp.allclose(out_tap, ref_ds, atol=ATOL, rtol=RTOL), \
        f"max abs diff {float(jnp.max(jnp.abs(out_tap - ref_ds)))}"

    print("KERNEL_OK")
</pallas_src>

<mosaic_0001>
module attributes {stable_mosaic.version = 11 : i64} {
  func.func @_packed_conv_kernel(%arg0: i32, %arg1: i32, %arg2: memref<1x64x128xbf16, #tpu.memory_space<vmem>>, %arg3: memref<128x128xbf16, #tpu.memory_space<vmem>>, %arg4: memref<1x64x128xbf16, #tpu.memory_space<vmem>>, %arg5: memref<1x1x8x128xf32, #tpu.memory_space<vmem>>) attributes {dimension_semantics = [#tpu.dimension_semantics<parallel>, #tpu.dimension_semantics<parallel>], iteration_bounds = array<i64: 2, 1>, scalar_prefetch = 0 : i64, scratch_operands = 0 : i64, tpu.core_type = #tpu.core_type<tc>, window_params = [{transform_indices = @transform_0, window_bounds = array<i64: 1, 64, 128>}, {pipeline_mode = #tpu.pipeline_mode<synchronous>, transform_indices = @transform_1, window_bounds = array<i64: 128, 128>}, {transform_indices = @transform_2, window_bounds = array<i64: 1, 64, 128>}, {transform_indices = @transform_3, window_bounds = array<i64: 1, 1, 8, 128>}]} {
    %c0 = arith.constant 0 : index
    %c0_0 = arith.constant 0 : index
    %c0_1 = arith.constant 0 : index
    %0 = vector.load %arg2[%c0, %c0_0, %c0_1] : memref<1x64x128xbf16, #tpu.memory_space<vmem>>, vector<1x64x128xbf16>
    %1 = vector.shape_cast %0 : vector<1x64x128xbf16> to vector<64x128xbf16>
    %c0_2 = arith.constant 0 : index
    %c0_3 = arith.constant 0 : index
    %2 = vector.load %arg3[%c0_2, %c0_3] : memref<128x128xbf16, #tpu.memory_space<vmem>>, vector<128x128xbf16>
    %cst = arith.constant dense<0.000000e+00> : vector<64x128xf32>
    %3 = tpu.matmul %1, %2, %cst {dimension_numbers = #tpu.dot_dimension_numbers<[1], [0], [0], [1], [0, 0, 1, 1], [], []>} : vector<64x128xbf16>, vector<128x128xbf16>, vector<64x128xf32> -> vector<64x128xf32>
    %4 = arith.truncf %3 : vector<64x128xf32> to vector<64x128xbf16>
    %c0_4 = arith.constant 0 : index
    %c0_5 = arith.constant 0 : index
    %c0_6 = arith.constant 0 : index
    %5 = vector.load %arg4[%c0_4, %c0_5, %c0_6] : memref<1x64x128xbf16, #tpu.memory_space<vmem>>, vector<1x64x128xbf16>
    %6 = vector.shape_cast %5 : vector<1x64x128xbf16> to vector<64x128xbf16>
    %7 = vector.shape_cast %4 : vector<64x128xbf16> to vector<1x64x128xbf16>
    tpu.vector_store %arg4[%c0_4, %c0_5, %c0_6], %7 {strides = array<i32>} : memref<1x64x128xbf16, #tpu.memory_space<vmem>>, vector<1x64x128xbf16>,
    %cst_7 = arith.constant dense<0.000000e+00> : vector<128xf32>
    %8 = vector.multi_reduction <add>, %3, %cst_7 [0] : vector<64x128xf32> to vector<128xf32>
    %9 = vector.shape_cast %8 : vector<128xf32> to vector<1x128xf32>
    %10 = arith.mulf %3, %3 : vector<64x128xf32>
    %cst_8 = arith.constant dense<0.000000e+00> : vector<128xf32>
    %11 = vector.multi_reduction <add>, %10, %cst_8 [0] : vector<64x128xf32> to vector<128xf32>
    %12 = vector.shape_cast %11 : vector<128xf32> to vector<1x128xf32>
    %13 = tpu.iota {dimensions = array<i32: 0>} : vector<8x128xi32>
    %c0_i32 = arith.constant 0 : i32
    %14 = vector.broadcast %c0_i32 : i32 to vector<8x128xi32>
    %15 = arith.cmpi eq, %13, %14 : vector<8x128xi32>
    %c1_i32 = arith.constant 1 : i32
    %16 = vector.broadcast %c1_i32 : i32 to vector<8x128xi32>
    %17 = arith.cmpi eq, %13, %16 : vector<8x128xi32>
    %cst_9 = arith.constant 0.000000e+00 : f32
    %18 = vector.shape_cast %12 : vector<1x128xf32> to vector<1x128xf32>
    %19 = vector.broadcast %18 : vector<1x128xf32> to vector<8x128xf32>
    %20 = vector.broadcast %cst_9 : f32 to vector<8x128xf32>
    %21 = arith.select %17, %19, %20 : vector<8x128xi1>, vector<8x128xf32>
    %22 = vector.shape_cast %9 : vector<1x128xf32> to vector<1x128xf32>
    %23 = vector.broadcast %22 : vector<1x128xf32> to vector<8x128xf32>
    %24 = arith.select %15, %23, %21 : vector<8x128xi1>, vector<8x128xf32>
    %c0_10 = arith.constant 0 : index
    %c0_11 = arith.constant 0 : index
    %c0_12 = arith.constant 0 : index
    %c0_13 = arith.constant 0 : index
    %25 = vector.load %arg5[%c0_10, %c0_11, %c0_12, %c0_13] : memref<1x1x8x128xf32, #tpu.memory_space<vmem>>, vector<1x1x8x128xf32>
    %26 = vector.shape_cast %25 : vector<1x1x8x128xf32> to vector<8x128xf32>
    %27 = vector.shape_cast %24 : vector<8x128xf32> to vector<1x1x8x128xf32>
    tpu.vector_store %arg5[%c0_10, %c0_11, %c0_12, %c0_13], %27 {strides = array<i32>} : memref<1x1x8x128xf32, #tpu.memory_space<vmem>>, vector<1x1x8x128xf32>,
    return
  }
  func.func @transform_0(%arg0: i32, %arg1: i32) -> (i32, i32, i32) {
    %c0_i32 = arith.constant 0 : i32
    %c0_i32_0 = arith.constant 0 : i32
    return %arg0, %arg1, %c0_i32 : i32, i32, i32
  }
  func.func @transform_1(%arg0: i32, %arg1: i32) -> (i32, i32) {
    %c0_i32 = arith.constant 0 : i32
    %c0_i32_0 = arith.constant 0 : i32
    %c0_i32_1 = arith.constant 0 : i32
    return %c0_i32, %c0_i32_0 : i32, i32
  }
  func.func @transform_2(%arg0: i32, %arg1: i32) -> (i32, i32, i32) {
    %c0_i32 = arith.constant 0 : i32
    %c0_i32_0 = arith.constant 0 : i32
    return %arg0, %arg1, %c0_i32 : i32, i32, i32
  }
  func.func @transform_3(%arg0: i32, %arg1: i32) -> (i32, i32, i32, i32) {
    %c0_i32 = arith.constant 0 : i32
    %c0_i32_0 = arith.constant 0 : i32
    %c0_i32_1 = arith.constant 0 : i32
    return %arg0, %arg1, %c0_i32, %c0_i32_0 : i32, i32, i32, i32
  }
}

</mosaic_0001>

<llo_original>
// kernel: tpu_custom_call.1
$region0: #{tpu_custom_call.1}
  #allocation0 [shape = 'u32[]', space=smem, size = 0x4, offset = 0x4, fixed_abs, tag = 'smem constant byte address 0x4 - core index']
  #allocation1 [shape = 'u32[144,128]{1,0:T(1,128)}', space=vmem, size = 0x12000, scoped, tag = 'internal scratch']
  %s0 = inlined_call_operand.hbm [shape: bf16[2,64,128], index: 0, kind: input, shape index: {}]
  %s1 = inlined_call_operand.hbm [shape: bf16[128,128], index: 1, kind: input, shape index: {}]
  %s2 = inlined_call_operand.hbm [shape: bf16[2,64,128], index: 2, kind: output, shape index: {0}]
  %s3 = inlined_call_operand.hbm [shape: f32[2,1,8,128], index: 3, kind: output, shape index: {1}]
  %4 = xla_tuple %s2, %s3
  %s5 = sld [smem:[#allocation0]]
  $region57: #{tpu_custom_call.1} parent=0
    _
  %s7 = ssub.s32 1, %s5
  %s8 = scalar_select 0, %s7, %s5
  $region1: #{tpu_custom_call.1} parent=0
    #allocation2 [shape = 'u8[32768]{0}', space=vmem, size = 0x8000, scoped, tag = 'input window, operand 0']
    #allocation3 [shape = 's32[2]{0}', space=sflag, size = 0x8, scoped, tag = 'scoped memory for tpu_custom_call.1']
    #allocation4 [shape = 's32[2]{0}', space=sflag, size = 0x8, scoped, tag = 'scoped memory for tpu_custom_call.1']
    #allocation5 [shape = 'u8[32768]{0}', space=vmem, size = 0x8000, scoped, tag = 'input window, operand 1, single buffered']
    #allocation6 [shape = 's32[1]{0}', space=sflag, size = 0x4, scoped, tag = 'scoped memory for tpu_custom_call.1']
    #allocation7 [shape = 'u8[32768]{0}', space=vmem, size = 0x8000, scoped, tag = 'output window, operand 0']
    #allocation8 [shape = 'u8[8192]{0}', space=vmem, size = 0x2000, scoped, tag = 'output window, operand 1']
    #allocation9 [shape = 's32[2]{0}', space=sflag, size = 0x8, scoped, tag = 'scoped memory for tpu_custom_call.1']
    %9 = vsyncpa [#allocation3], 0
    %s10 = scalar_lea.sflag [#allocation3], 1
    %11 = vsyncpa %s10, 0
    %12 = vsyncpa [#allocation6], 0
    %13 = vsyncpa [#allocation4], 0
    %s14 = scalar_lea.sflag [#allocation4], 1
    %15 = vsyncpa %s14, 0
    %16 = vsyncpa [#allocation9], 0
    %s17 = scalar_lea.sflag [#allocation9], 1
    %18 = vsyncpa %s17, 0
    loop: start=0, step=1, limit=4
    $region2: #{tpu_custom_call.1} parent=1 // loop_pre_header
      _
    $region3: #{tpu_custom_call.1} parent=1 // loop_header
      %s20 = sphi 0, %s24
      %p21 = scmp.ge.s32.totalorder %s20, 4
      %s27 = sphi 0, %s39
      %s28 = sphi 0, %s35
      %s29 = sphi 0, %s27
      %s30 = sphi 0, %s28
      %s31 = sphi 0, %s29
      %s32 = sphi 0, %s30
      %s44 = sphi 0, %s46
      %s47 = sphi 0, %s44
      %s48 = sphi 0, %s47
      %s64 = sphi 0, %s48
      %s68 = sphi 0, %s68
      %s70 = sphi 0, %s68
      %s71 = sphi 0, %s70
      %s85 = sphi 0, %s71
      %s93 = sphi 0, %s95
      %s96 = sphi 0, %s93
      %s97 = sphi 0, %s96
      %s113 = sphi 0, %s97
      %s121 = sphi 0, %s123
      %s124 = sphi 0, %s121
      %s125 = sphi 0, %s124
      %s141 = sphi 0, %s125
    $region4: #{tpu_custom_call.1} parent=1 // loop_header_branch
      %23 = sbr.rel (%p21) target = $region8
    $region5: #{tpu_custom_call.1} parent=1 // loop_body
      %s25 = ssub.s32 %s20, 1
      %s26 = ssub.s32 %s20, 2
      %s33 = sadd.s32 1, %s28
      %p34 = scmp.ge.s32.totalorder %s33, 1
      %s35 = scalar_select %p34, 0, %s33
      %s36 = sadd.s32 1, %s27
      %s37 = scalar_select %p34, %s36, %s27
      %p38 = scmp.ge.s32.totalorder %s37, 2
      %s39 = scalar_select %p38, 0, %s37
      %s40 = ssub.s32 %s27, %s39
      %s41 = ssub.s32 %s28, %s35
      %s42 = sor.u32 %s40, %s41
      %p43 = scmp.eq.s32.totalorder %s42, 0
      %s45 = sadd.s32 %s44, 1
      %s46 = scalar_select %p43, %s44, %s45
      %p49 = pneg %p43
      %p50 = scmp.eq.s32.totalorder %s20, 1
      %p51 = por %p49, %p50
      %p52 = scmp.ne.s32.totalorder %s44, %s47
      %p53 = scmp.eq.s32.totalorder %s20, 0
      %p54 = por %p52, %p53
      %p55 = scmp.ne.s32.totalorder %s44, %s47
      %p56 = scmp.eq.s32.totalorder %s25, 1
      %p57 = por %p55, %p56
      %p58 = scmp.ne.s32.totalorder %s47, %s48
      %p59 = scmp.eq.s32.totalorder %s25, 0
      %p60 = por %p58, %p59
      %p61 = scmp.ne.s32.totalorder %s47, %s48
      %p62 = scmp.eq.s32.totalorder %s26, 1
      %p63 = por %p61, %p62
      %p65 = scmp.ne.s32.totalorder %s48, %s64
      %p66 = scmp.eq.s32.totalorder %s26, 0
      %p67 = por %p65, %p66
      %s69 = sadd.s32 %s68, 1
      %p72 = scmp.eq.s32.totalorder %s20, 1
      %p73 = scmp.ne.s32.totalorder %s68, %s70
      %p74 = scmp.eq.s32.totalorder %s20, 0
      %p75 = por %p73, %p74
      %p76 = scmp.ne.s32.totalorder %s68, %s70
      %p77 = scmp.eq.s32.totalorder %s25, 1
      %p78 = por %p76, %p77
      %p79 = scmp.ne.s32.totalorder %s70, %s71
      %p80 = scmp.eq.s32.totalorder %s25, 0
      %p81 = por %p79, %p80
      %p82 = scmp.ne.s32.totalorder %s70, %s71
      %p83 = scmp.eq.s32.totalorder %s26, 1
      %p84 = por %p82, %p83
      %p86 = scmp.ne.s32.totalorder %s71, %s85
      %p87 = scmp.eq.s32.totalorder %s26, 0
      %p88 = por %p86, %p87
      %s89 = ssub.s32 %s27, %s39
      %s90 = ssub.s32 %s28, %s35
      %s91 = sor.u32 %s89, %s90
      %p92 = scmp.eq.s32.totalorder %s91, 0
      %s94 = sadd.s32 %s93, 1
      %s95 = scalar_select %p92, %s93, %s94
      %p98 = pneg %p92
      %p99 = scmp.eq.s32.totalorder %s20, 1
      %p100 = por %p98, %p99
      %p101 = scmp.ne.s32.totalorder %s93, %s96
      %p102 = scmp.eq.s32.totalorder %s20, 0
      %p103 = por %p101, %p102
      %p104 = scmp.ne.s32.totalorder %s93, %s96
      %p105 = scmp.eq.s32.totalorder %s25, 1
      %p106 = por %p104, %p105
      %p107 = scmp.ne.s32.totalorder %s96, %s97
      %p108 = scmp.eq.s32.totalorder %s25, 0
      %p109 = por %p107, %p108
      %p110 = scmp.ne.s32.totalorder %s96, %s97
      %p111 = scmp.eq.s32.totalorder %s26, 1
      %p112 = por %p110, %p111
      %p114 = scmp.ne.s32.totalorder %s97, %s113
      %p115 = scmp.eq.s32.totalorder %s26, 0
      %p116 = por %p114, %p115
      %s117 = ssub.s32 %s27, %s39
      %s118 = ssub.s32 %s28, %s35
      %s119 = sor.u32 %s117, %s118
      %p120 = scmp.eq.s32.totalorder %s119, 0
      %s122 = sadd.s32 %s121, 1
      %s123 = scalar_select %p120, %s121, %s122
      %p126 = pneg %p120
      %p127 = scmp.eq.s32.totalorder %s20, 1
      %p128 = por %p126, %p127
      %p129 = scmp.ne.s32.totalorder %s121, %s124
      %p130 = scmp.eq.s32.totalorder %s20, 0
      %p131 = por %p129, %p130
      %p132 = scmp.ne.s32.totalorder %s121, %s124
      %p133 = scmp.eq.s32.totalorder %s25, 1
      %p134 = por %p132, %p133
      %p135 = scmp.ne.s32.totalorder %s124, %s125
      %p136 = scmp.eq.s32.totalorder %s25, 0
      %p137 = por %p135, %p136
      %p138 = scmp.ne.s32.totalorder %s124, %s125
      %p139 = scmp.eq.s32.totalorder %s26, 1
      %p140 = por %p138, %p139
      %p142 = scmp.ne.s32.totalorder %s125, %s141
      %p143 = scmp.eq.s32.totalorder %s26, 0
      %p144 = por %p142, %p143
      %p145 = scmp.le.s32.totalorder 1, %s20
      %p146 = scmp.lt.s32.totalorder %s20, 3
      %p147 = pnand %p145, %p146
      %p148 = pneg %p147
      // Predicated region
      $region9: #{tpu_custom_call.1} parent=5 // pred_check
        _
      $region10: #{tpu_custom_call.1} parent=5 // pred_check_branch
        %150 = sbr.rel (%p147) target = $region12
      $region11: #{tpu_custom_call.1} parent=5 // pred_region
        %s151 = ssub.s32 %s20, 1
        // Predicated region
        $region13: #{tpu_custom_call.1} parent=11 // pred_check
          %p152 = pneg %p81
        $region14: #{tpu_custom_call.1} parent=11 // pred_check_branch
          %154 = sbr.rel (%p152) target = $region16
        $region15: #{tpu_custom_call.1} parent=11 // pred_region
          %s156 = ssub.s32 1024, 1024
          %157 = vsyncadd [#allocation6], %s156
          %s158 = sshll.u32 [#allocation5], 4
          %s159 = int_to_ptr.vmem [resolvable:$true] %s158
          %164 = dma.hbm_to_vmem [thread:$0]  %s1, 1024, %s159, [#allocation6], 64, 64, 4
        $region16: #{tpu_custom_call.1} parent=11 // pred_fallthru
          _
      $region12: #{tpu_custom_call.1} parent=5 // pred_fallthru
        _
      %p165 = scmp.lt.s32.totalorder %s20, 2
      // Predicated region
      $region17: #{tpu_custom_call.1} parent=5 // pred_check
        %p166 = pneg %p165
      $region18: #{tpu_custom_call.1} parent=5 // pred_check_branch
        %168 = sbr.rel (%p166) target = $region20
      $region19: #{tpu_custom_call.1} parent=5 // pred_region
        // Predicated region
        $region21: #{tpu_custom_call.1} parent=19 // pred_check
          %p169 = pneg %p54
        $region22: #{tpu_custom_call.1} parent=19 // pred_check_branch
          %171 = sbr.rel (%p169) target = $region24
        $region23: #{tpu_custom_call.1} parent=19 // pred_region
          %s172 = sand.u32 %s44, 1
          %s173 = scalar_lea.sflag [#allocation3], %s172
          %s174 = sand.u32 %s44, 1
          %s175 = smul.addr %s174, 32
          %s176 = scalar_lea.vmem [#allocation2], %s175
          %s177 = smul.u32 8, %s28
          %s179 = ssub.s32 512, 512
          %180 = vsyncadd %s173, %s179
          %s181 = smul.addr %s27, 8
          %s182 = sadd.s32 %s177, %s181
          %s183 = smul.addr %s182, 64
          %s184 = scalar_lea.hbm %s0, %s183
          %s185 = sshll.u32 %s176, 4
          %s186 = int_to_ptr.vmem [resolvable:$true] %s185
          %191 = dma.hbm_to_vmem [thread:$0]  %s184, 512, %s186, %s173, 64, 64, 4
        $region24: #{tpu_custom_call.1} parent=19 // pred_fallthru
          _
      $region20: #{tpu_custom_call.1} parent=5 // pred_fallthru
        _
      %p192 = scmp.le.s32.totalorder 1, %s20
      %p193 = scmp.lt.s32.totalorder %s20, 3
      %p194 = pnand %p192, %p193
      %p195 = pneg %p194
      // Predicated region
      $region25: #{tpu_custom_call.1} parent=5 // pred_check
        _
      $region26: #{tpu_custom_call.1} parent=5 // pred_check_branch
        %197 = sbr.rel (%p194) target = $region28
      $region27: #{tpu_custom_call.1} parent=5 // pred_region
        %s198 = ssub.s32 %s20, 1
        %s199 = sand.u32 %s47, 1
        %s200 = scalar_lea.sflag [#allocation3], %s199
        %s201 = sand.u32 %s47, 1
        %s202 = smul.addr %s201, 32
        %s203 = scalar_lea.vmem [#allocation2], %s202
        // Predicated region
        $region29: #{tpu_custom_call.1} parent=27 // pred_check
          %p204 = pneg %p60
        $region30: #{tpu_custom_call.1} parent=27 // pred_check_branch
          %206 = sbr.rel (%p204) target = $region32
        $region31: #{tpu_custom_call.1} parent=27 // pred_region
          %207 = dma.done %s200, 512
        $region32: #{tpu_custom_call.1} parent=27 // pred_fallthru
          _
        // Predicated region
        $region33: #{tpu_custom_call.1} parent=27 // pred_check
          %p208 = pneg %p81
        $region34: #{tpu_custom_call.1} parent=27 // pred_check_branch
          %210 = sbr.rel (%p208) target = $region36
        $region35: #{tpu_custom_call.1} parent=27 // pred_region
          %211 = dma.done [#allocation6], 1024
        $region36: #{tpu_custom_call.1} parent=27 // pred_fallthru
          _
        %s212 = sand.u32 %s47, 1
        %s213 = scalar_lea.sflag [#allocation3], %s212
        %s214 = sand.u32 %s47, 1
        %s215 = smul.addr %s214, 32
        %s216 = scalar_lea.vmem [#allocation2], %s215
        %p217 = pneg %p60
        %p218 = pneg %p57
        %p219 = pneg %p81
        %p220 = pneg %p78
        %p221 = pneg %p109
        %p222 = pneg %p106
        %s223 = sand.u32 %s96, 1
        %s224 = scalar_lea.sflag [#allocation4], %s223
        %s225 = sand.u32 %s96, 1
        %s226 = smul.addr %s225, 32
        %s227 = scalar_lea.vmem [#allocation7], %s226
        %p228 = pneg %p137
        %p229 = pneg %p134
        %s230 = sand.u32 %s124, 1
        %s231 = scalar_lea.sflag [#allocation9], %s230
        %s232 = sand.u32 %s124, 1
        %s233 = smul.addr %s232, 8
        %s234 = scalar_lea.vmem [#allocation8], %s233
        %s235 = smul.u32 8, %s30
        %s236 = smul.u32 8, %s30
        %v238 = vld [vmem:[%s203] sm:$0xf]
        %v239 = vld [vmem:[%s203 + $0x4] sm:$0xf]
        %v240 = vld [vmem:[%s203 + $0x8] sm:$0xf]
        %v241 = vld [vmem:[%s203 + $0xc] sm:$0xf]
        %v242 = vld [vmem:[%s203 + $0x10] sm:$0xf]
        %v243 = vld [vmem:[%s203 + $0x14] sm:$0xf]
        %v244 = vld [vmem:[%s203 + $0x18] sm:$0xf]
        %v245 = vld [vmem:[%s203 + $0x1c] sm:$0xf]
        %v246 = vld [vmem:[#allocation5] sm:$0xf]
        %v247 = vld [vmem:[#allocation5 + $0x4] sm:$0xf]
        %v248 = vld [vmem:[#allocation5 + $0x8] sm:$0xf]
        %v249 = vld [vmem:[#allocation5 + $0xc] sm:$0xf]
        %v250 = vld [vmem:[#allocation5 + $0x10] sm:$0xf]
        %v251 = vld [vmem:[#allocation5 + $0x14] sm:$0xf]
        %v252 = vld [vmem:[#allocation5 + $0x18] sm:$0xf]
        %v253 = vld [vmem:[#allocation5 + $0x1c] sm:$0xf]
        %v254 = vld [vmem:[#allocation5 + $0x20] sm:$0xf]
        %v255 = vld [vmem:[#allocation5 + $0x24] sm:$0xf]
        %v256 = vld [vmem:[#allocation5 + $0x28] sm:$0xf]
        %v257 = vld [vmem:[#allocation5 + $0x2c] sm:$0xf]
        %v258 = vld [vmem:[#allocation5 + $0x30] sm:$0xf]
        %v259 = vld [vmem:[#allocation5 + $0x34] sm:$0xf]
        %v260 = vld [vmem:[#allocation5 + $0x38] sm:$0xf]
        %v261 = vld [vmem:[#allocation5 + $0x3c] sm:$0xf]
        %v270 = vunpack.c.l.b16 %v238
        %v271 = vunpack.c.l.b16 %v239
        %v272 = vunpack.c.l.b16 %v240
        %v273 = vunpack.c.l.b16 %v241
        %v274 = vunpack.c.l.b16 %v242
        %v275 = vunpack.c.l.b16 %v243
        %v276 = vunpack.c.l.b16 %v244
        %v277 = vunpack.c.l.b16 %v245
        %v278 = vpack.c.b16 %v271, %v270
        %v279 = vpack.c.b16 %v273, %v272
        %v280 = vpack.c.b16 %v275, %v274
        %v281 = vpack.c.b16 %v277, %v276
        %v302 = vunpack.c.l.b16 %v246
        %v303 = vunpack.c.l.b16 %v247
        %v304 = vunpack.c.l.b16 %v248
        %v305 = vunpack.c.l.b16 %v249
        %v306 = vunpack.c.l.b16 %v250
        %v307 = vunpack.c.l.b16 %v251
        %v308 = vunpack.c.l.b16 %v252
        %v309 = vunpack.c.l.b16 %v253
        %v310 = vunpack.c.l.b16 %v254
        %v311 = vunpack.c.l.b16 %v255
        %v312 = vunpack.c.l.b16 %v256
        %v313 = vunpack.c.l.b16 %v257
        %v314 = vunpack.c.l.b16 %v258
        %v315 = vunpack.c.l.b16 %v259
        %v316 = vunpack.c.l.b16 %v260
        %v317 = vunpack.c.l.b16 %v261
        %v318 = vpack.c.b16 %v303, %v302
        %v319 = vpack.c.b16 %v305, %v304
        %v320 = vpack.c.b16 %v307, %v306
        %v321 = vpack.c.b16 %v309, %v308
        %v322 = vpack.c.b16 %v311, %v310
        %v323 = vpack.c.b16 %v313, %v312
        %v324 = vpack.c.b16 %v315, %v314
        %v325 = vpack.c.b16 %v317, %v316
        %334 = vmatprep.subr.bf16.mxu0 0
        %335 = vmatpush1.bf16.msra.mxu0 %v318
        %336 = vmatprep.subr.bf16.mxu0 0
        %337 = vmatpush1.bf16.msra.mxu0 %v319
        %338 = vmatprep.subr.bf16.mxu0 0
        %339 = vmatpush1.bf16.msra.mxu0 %v320
        %340 = vmatprep.subr.bf16.mxu0 0
        %341 = vmatpush1.bf16.msra.mxu0 %v321
        %342 = vmatprep.subr.bf16.mxu0 0
        %343 = vmatpush1.bf16.msra.mxu0 %v322
        %344 = vmatprep.subr.bf16.mxu0 0
        %345 = vmatpush1.bf16.msra.mxu0 %v323
        %346 = vmatprep.subr.bf16.mxu0 0
        %347 = vmatpush1.bf16.msra.mxu0 %v324
        %348 = vmatprep.subr.bf16.mxu0 0
        %349 = vmatpush1.bf16.msra.mxu0 %v325
        %350 = vmatprep.subr.bf16.mxu0 0
        %351 = vmatpush1.bf16.msra.mxu0 0
        %352 = vmatprep.subr.bf16.mxu0 0
        %353 = vmatpush1.bf16.msra.mxu0 0
        %354 = vmatprep.subr.bf16.mxu0 0
        %355 = vmatpush1.bf16.msra.mxu0 0
        %356 = vmatprep.subr.bf16.mxu0 0
        %357 = vmatpush1.bf16.msra.mxu0 0
        %358 = vmatprep.subr.bf16.mxu0 0
        %359 = vmatpush1.bf16.msra.mxu0 0
        %360 = vmatprep.subr.bf16.mxu0 0
        %361 = vmatpush1.bf16.msra.mxu0 0
        %362 = vmatprep.subr.bf16.mxu0 0
        %363 = vmatpush1.bf16.msra.mxu0 0
        %364 = vmatprep.subr.bf16.mxu0 0
        %365 = vmatpush1.bf16.msra.mxu0 0
        %366 = vmatprep.mubr.bf16.mxu0 0
        %367 = vmatmul.mubr.bf16.gmra.mrb[0].mxu0 %v278
        %v368 = vpop.f32.mrb[0].mxu0
        %v369 = vadd.f32 0.0, %v368
        %v370 = vpop.f32.mrb[0].mxu0
        %v371 = vpop.f32.mrb[0].mxu0
        %v372 = vadd.f32 0.0, %v371
        %v373 = vpop.f32.mrb[0].mxu0
        %374 = vmatprep.mubr.bf16.mxu0 0
        %375 = vmatmul.mubr.bf16.gmra.mrb[0].mxu0 %v279
        %v376 = vpop.f32.mrb[0].mxu0
        %v377 = vadd.f32 0.0, %v376
        %v378 = vpop.f32.mrb[0].mxu0
        %v379 = vpop.f32.mrb[0].mxu0
        %v380 = vadd.f32 0.0, %v379
        %v381 = vpop.f32.mrb[0].mxu0
        %382 = vmatprep.mubr.bf16.mxu0 0
        %383 = vmatmul.mubr.bf16.gmra.mrb[0].mxu0 %v280
        %v384 = vpop.f32.mrb[0].mxu0
        %v385 = vadd.f32 0.0, %v384
        %v386 = vpop.f32.mrb[0].mxu0
        %v387 = vpop.f32.mrb[0].mxu0
        %v388 = vadd.f32 0.0, %v387
        %v389 = vpop.f32.mrb[0].mxu0
        %390 = vmatprep.mubr.bf16.mxu0 0
        %391 = vmatmul.mubr.bf16.gmra.mrb[0].mxu0 %v281
        %v392 = vpop.f32.mrb[0].mxu0
        %v393 = vadd.f32 0.0, %v392
        %v394 = vpop.f32.mrb[0].mxu0
        %v395 = vpop.f32.mrb[0].mxu0
        %v396 = vadd.f32 0.0, %v395
        %v397 = vpop.f32.mrb[0].mxu0
        %398 = vdwg.mxu0
        %v399 = vpack.c.bf16 %v372, %v369
        %v400 = vpack.c.bf16 %v380, %v377
        %v401 = vpack.c.bf16 %v388, %v385
        %v402 = vpack.c.bf16 %v396, %v393
        %v407 = vunpack.c.l.b16 %v399
        %v408 = vunpack.c.h.b16 %v399
        %v409 = vunpack.c.l.b16 %v400
        %v410 = vunpack.c.h.b16 %v400
        %v411 = vunpack.c.l.b16 %v401
        %v412 = vunpack.c.h.b16 %v401
        %v413 = vunpack.c.l.b16 %v402
        %v414 = vunpack.c.h.b16 %v402
        %v415 = vpack.c.b16 %v407, %v407
        %v416 = vpack.c.b16 %v408, %v408
        %v417 = vpack.c.b16 %v409, %v409
        %v418 = vpack.c.b16 %v410, %v410
        %v419 = vpack.c.b16 %v411, %v411
        %v420 = vpack.c.b16 %v412, %v412
        %v421 = vpack.c.b16 %v413, %v413
        %v422 = vpack.c.b16 %v414, %v414
        %431 = vst [vmem:[%s227] sm:$0xf] %v415
        %432 = vst [vmem:[%s227 + $0x4] sm:$0xf] %v416
        %433 = vst [vmem:[%s227 + $0x8] sm:$0xf] %v417
        %434 = vst [vmem:[%s227 + $0xc] sm:$0xf] %v418
        %435 = vst [vmem:[%s227 + $0x10] sm:$0xf] %v419
        %436 = vst [vmem:[%s227 + $0x14] sm:$0xf] %v420
        %437 = vst [vmem:[%s227 + $0x18] sm:$0xf] %v421
        %438 = vst [vmem:[%s227 + $0x1c] sm:$0xf] %v422
        %v439 = vadd.f32 %v369, %v372
        %v440 = vadd.f32 %v439, %v377
        %v441 = vadd.f32 %v440, %v380
        %v442 = vadd.f32 %v441, %v385
        %v443 = vadd.f32 %v442, %v388
        %v444 = vadd.f32 %v443, %v393
        %v445 = vadd.f32 %v444, %v396
        %v446 = vrot.slane %v445, 4
        %v447 = vadd.f32 %v445, %v446
        %v448 = vrot.slane %v447, 2
        %v449 = vadd.f32 %v447, %v448
        %v450 = vrot.slane %v449, 1
        %v451 = vadd.f32 %v449, %v450
        %v452 = vmul.f32 %v369, %v369
        %v453 = vmul.f32 %v372, %v372
        %v454 = vmul.f32 %v377, %v377
        %v455 = vmul.f32 %v380, %v380
        %v456 = vmul.f32 %v385, %v385
        %v457 = vmul.f32 %v388, %v388
        %v458 = vmul.f32 %v393, %v393
        %v459 = vmul.f32 %v396, %v396
        %v460 = vadd.f32 %v452, %v453
        %v461 = vadd.f32 %v460, %v454
        %v462 = vadd.f32 %v461, %v455
        %v463 = vadd.f32 %v462, %v456
        %v464 = vadd.f32 %v463, %v457
        %v465 = vadd.f32 %v464, %v458
        %v466 = vadd.f32 %v465, %v459
        %v467 = vrot.slane %v466, 4
        %v468 = vadd.f32 %v466, %v467
        %v469 = vrot.slane %v468, 2
        %v470 = vadd.f32 %v468, %v469
        %v471 = vrot.slane %v470, 1
        %v472 = vadd.f32 %v470, %v471
        %v473 = vlaneseq
        %v474 = vshrl.u32 %v473, 7
        %vm475 = vcmp.eq.s32.totalorder %v474, 0
        %vm476 = vcmp.eq.s32.totalorder %v474, 1
        %v477 = vsel %vm476, %v472, 0.0
        %v478 = vsel %vm475, %v451, %v477
        %479 = vst [vmem:[%s234] sm:$0xff] %v478
        %s480 = sand.u32 %s96, 1
        %s481 = scalar_lea.sflag [#allocation4], %s480
        %s482 = sand.u32 %s96, 1
        %s483 = smul.addr %s482, 32
        %s484 = scalar_lea.vmem [#allocation7], %s483
        %s485 = sand.u32 %s124, 1
        %s486 = scalar_lea.sflag [#allocation9], %s485
        %s487 = sand.u32 %s124, 1
        %s488 = smul.addr %s487, 8
        %s489 = scalar_lea.vmem [#allocation8], %s488
        // Predicated region
        $region37: #{tpu_custom_call.1} parent=27 // pred_check
          %p490 = pneg %p106
        $region38: #{tpu_custom_call.1} parent=27 // pred_check_branch
          %492 = sbr.rel (%p490) target = $region40
        $region39: #{tpu_custom_call.1} parent=27 // pred_region
          %s493 = smul.u32 8, %s30
          %s495 = ssub.s32 512, 512
          %496 = vsyncadd %s481, %s495
          %s497 = smul.addr %s29, 8
          %s498 = sadd.s32 %s493, %s497
          %s499 = smul.addr %s498, 64
          %s500 = scalar_lea.hbm %s2, %s499
          %s501 = sshll.u32 %s484, 4
          %s502 = int_to_ptr.vmem [resolvable:$true] %s501
          %507 = dma.vmem_to_hbm [thread:$0]  %s502, 512, %s500, %s481, 64, 64, 4
        $region40: #{tpu_custom_call.1} parent=27 // pred_fallthru
          _
        // Predicated region
        $region41: #{tpu_custom_call.1} parent=27 // pred_check
          %p508 = pneg %p134
        $region42: #{tpu_custom_call.1} parent=27 // pred_check_branch
          %510 = sbr.rel (%p508) target = $region44
        $region43: #{tpu_custom_call.1} parent=27 // pred_region
          %s512 = ssub.s32 128, 128
          %513 = vsyncadd %s486, %s512
          %s514 = sadd.s32 %s30, %s29
          %s515 = smul.addr %s514, 128
          %s516 = scalar_lea.hbm %s3, %s515
          %s518 = sshll.u32 %s489, 4
          %s519 = int_to_ptr.vmem [resolvable:$true] %s518
          %521 = dma.vmem_to_hbm [thread:$0]  %s519, 128, %s516, %s486
        $region44: #{tpu_custom_call.1} parent=27 // pred_fallthru
          _
      $region28: #{tpu_custom_call.1} parent=5 // pred_fallthru
        _
      %p522 = scmp.le.s32.totalorder 2, %s20
      // Predicated region
      $region45: #{tpu_custom_call.1} parent=5 // pred_check
        %p523 = pneg %p522
      $region46: #{tpu_custom_call.1} parent=5 // pred_check_branch
        %525 = sbr.rel (%p523) target = $region48
      $region47: #{tpu_custom_call.1} parent=5 // pred_region
        %s526 = ssub.s32 %s20, 2
        // Predicated region
        $region49: #{tpu_custom_call.1} parent=47 // pred_check
          %p527 = pneg %p112
        $region50: #{tpu_custom_call.1} parent=47 // pred_check_branch
          %529 = sbr.rel (%p527) target = $region52
        $region51: #{tpu_custom_call.1} parent=47 // pred_region
          %s530 = sand.u32 %s97, 1
          %s531 = scalar_lea.sflag [#allocation4], %s530
          %s532 = sand.u32 %s97, 1
          %s533 = smul.addr %s532, 32
          %s534 = scalar_lea.vmem [#allocation7], %s533
          %535 = dma.done %s531, 512
        $region52: #{tpu_custom_call.1} parent=47 // pred_fallthru
          _
        // Predicated region
        $region53: #{tpu_custom_call.1} parent=47 // pred_check
          %p536 = pneg %p140
        $region54: #{tpu_custom_call.1} parent=47 // pred_check_branch
          %538 = sbr.rel (%p536) target = $region56
        $region55: #{tpu_custom_call.1} parent=47 // pred_region
          %s539 = sand.u32 %s125, 1
          %s540 = scalar_lea.sflag [#allocation9], %s539
          %s541 = sand.u32 %s125, 1
          %s542 = smul.addr %s541, 8
          %s543 = scalar_lea.vmem [#allocation8], %s542
          %544 = dma.done %s540, 128
        $region56: #{tpu_custom_call.1} parent=47 // pred_fallthru
          _
      $region48: #{tpu_custom_call.1} parent=5 // pred_fallthru
        _
    $region6: #{tpu_custom_call.1} parent=1 // loop_footer
      %s24 = sadd.s32 1, %s20
    $region7: #{tpu_custom_call.1} parent=1 // loop_footer_branch
      %19 = sbr.rel target = $region3
    $region8: #{tpu_custom_call.1} parent=1 // loop_exit
      _
    %545 = vsyncpa [#allocation3], 1
    %s546 = scalar_lea.sflag [#allocation3], 1
    %547 = vsyncpa %s546, 1
    %548 = vsyncpa [#allocation6], 1
    %549 = vsyncpa [#allocation4], 1
    %s550 = scalar_lea.sflag [#allocation4], 1
    %551 = vsyncpa %s550, 1
    %552 = vsyncpa [#allocation9], 1
    %s553 = scalar_lea.sflag [#allocation9], 1
    %554 = vsyncpa %s553, 1

</llo_original>
